<compile_context>
chip_gen: v6e
topology: v6e:2x2x1
jax: 0.10.0
libtpu: 0.0.40
codegen_flags: <defaults>
</compile_context>

<pallas_src>
import jax
import jax.numpy as jnp
from jax import lax
from jax.experimental import pallas as pl
from jax.experimental.pallas import tpu as pltpu


def _round_up(x: int, m: int) -> int:
    return ((x + m - 1) // m) * m


def _num_tensorcores_per_chip() -> int:
    """Heuristic: 2 TensorCores per chip on v7x-class parts, else 1."""
    try:
        kind = jax.devices()[0].device_kind.lower()
    except Exception:
        return 1
    return 2 if ("v7" in kind or "7x" in kind) else 1


def _choose_tiles(b: int, n: int, itemsize: int):
    """Pick (tb, tn) so each input block is ~2-4 MiB of HBM bytes while the
    sublane-padded, double-buffered VMEM footprint stays v7x-safe (<~24 MiB)."""
    sub = max(1, 32 // itemsize)               # physical sublane rows per tile
    if b <= 64:
        tb = b                                  # whole batch in one block
    else:
        tb = 64                                 # multiple of 8; ragged batch tail
                                                # rows are dropped on write
    padded_tb = _round_up(tb, sub)              # rows actually resident in VMEM

    per_buf_vmem_cap = 6 * 1024 * 1024          # x (2 inputs x 2 bufs) <= 24 MiB
    logical_block_target = 4 * 1024 * 1024      # HBM bytes per input block/step

    tn = min(per_buf_vmem_cap // (padded_tb * itemsize),
             logical_block_target // max(1, tb * itemsize))
    tn = max(128, (tn // 128) * 128)
    if n <= tn:
        tn = n                                  # single full-width lane block
    return tb, tn, padded_tb


def _make_psnr_kernel(n: int, tn: int, k_steps: int):
    def kernel(raw_ref, dst_ref, out_ref):
        s = pl.program_id(0)
        k = pl.program_id(2)

        @pl.when(k == 0)
        def _():
            out_ref[...] = jnp.zeros_like(out_ref)

        diff = raw_ref[...].astype(jnp.float32) - dst_ref[...].astype(jnp.float32)
        # Zero lanes past the true element count: covers the ragged last tile
        # and any clamped duplicate tile created by rounding n_blocks up to
        # n_splits * k_steps (those then contribute exactly zero).
        col0 = (s * k_steps + k) * tn
        lane = lax.broadcasted_iota(jnp.int32, diff.shape, 1)
        diff = jnp.where(col0 + lane < n, diff, 0.0)
        out_ref[...] += jnp.sum(diff * diff, axis=1, keepdims=True)[None]

    return kernel


def psnr_pallas(raw_images: jax.Array, dst_images: jax.Array, *,
                tile_n: int | None = None) -> jax.Array:
    """raw_images, dst_images: (B, C, H, W) arrays in [0, 1]. Returns scalar PSNR."""
    assert raw_images.shape == dst_images.shape
    b = raw_images.shape[0]
    n = 1
    for d in raw_images.shape[1:]:
        n *= d

    itemsize = max(raw_images.dtype.itemsize, dst_images.dtype.itemsize)
    tb, tn, padded_tb = _choose_tiles(b, n, itemsize)
    if tile_n is not None:
        assert tile_n == n or tile_n % 128 == 0, "tile_n must be a multiple of 128"
        tn = tile_n

    n_blocks = pl.cdiv(n, tn)
    b_blocks = pl.cdiv(b, tb)

    # Lane-range split only on 2-TC chips (v7x); pure overhead on v5e/v6e.
    n_splits = 2 if (_num_tensorcores_per_chip() == 2 and n_blocks >= 2) else 1
    k_steps = pl.cdiv(n_blocks, n_splits)

    # Free views; no padding / copying of the inputs.
    raw_flat = raw_images.reshape(b, n)
    dst_flat = dst_images.reshape(b, n)

    def in_map(s, bi, k):
        # Clamp fully-out-of-range tiles back in range; the kernel's lane mask
        # zeroes their contribution.
        return (bi, jnp.minimum(s * k_steps + k, n_blocks - 1))

    def out_map(s, bi, k):
        return (s, bi, 0)

    split_sem = pltpu.CORE_PARALLEL if n_splits > 1 else pltpu.ARBITRARY

    # 2 inputs x 2 pipeline buffers of the sublane-padded block, plus headroom.
    in_buf_bytes = 2 * 2 * padded_tb * tn * itemsize
    vmem_limit = int(min(48 * 2**20, max(32 * 2**20, in_buf_bytes + 8 * 2**20)))

    partial_sums = pl.pallas_call(
        _make_psnr_kernel(n, tn, k_steps),
        out_shape=jax.ShapeDtypeStruct((n_splits, b, 1), jnp.float32),
        grid_spec=pltpu.PrefetchScalarGridSpec(
            num_scalar_prefetch=0,
            grid=(n_splits, b_blocks, k_steps),
            in_specs=[
                pl.BlockSpec((tb, tn), in_map),
                pl.BlockSpec((tb, tn), in_map),
            ],
            out_specs=pl.BlockSpec((1, tb, 1), out_map),
        ),
        compiler_params=pltpu.CompilerParams(
            dimension_semantics=(split_sem, pltpu.PARALLEL, pltpu.ARBITRARY),
            vmem_limit_bytes=vmem_limit,
        ),
    )(raw_flat, dst_flat)

    # Tiny epilogue in plain JAX: per-image MSE -> PSNR -> batch mean.
    # eps is applied in the 255-scaled domain to match the reference exactly.
    sum_sq = jnp.sum(partial_sums[:, :, 0], axis=0)           # (B,)
    mse = 65025.0 * sum_sq / float(n) + 1e-08                 # 255^2 = 65025
    psnr = 10.0 * jnp.log10(65025.0 / mse)
    return jnp.mean(psnr)


def psnr_ref(raw_images: jax.Array, dst_images: jax.Array) -> jax.Array:
    mse = jnp.mean(
        (raw_images * 255.0 - dst_images * 255.0) ** 2 + 1e-08, axis=[1, 2, 3]
    )
    psnr = 10.0 * jnp.log10(255.0 ** 2 / mse)
    return jnp.mean(psnr, axis=0)


if __name__ == "__main__":
    key = jax.random.PRNGKey(0)
    k1, k2 = jax.random.split(key)
    # Small shapes consistent with the module's NCHW image inputs.
    raw = jax.random.uniform(k1, (2, 4, 16, 16), dtype=jnp.float32)
    dst = jax.random.uniform(k2, (2, 4, 16, 16), dtype=jnp.float32)

    out = jax.block_until_ready(psnr_pallas(raw, dst))
    ref = psnr_ref(raw, dst)
    assert jnp.allclose(out, ref, rtol=1e-4, atol=1e-4), (out, ref)

    # Exercise the multi-tile path with a ragged (masked) last tile: n = 1728
    # is not a multiple of the forced 256-lane tile, and no padding is done.
    k3, k4 = jax.random.split(k2)
    raw2 = jax.random.uniform(k3, (2, 3, 24, 24), dtype=jnp.float32)
    dst2 = jax.random.uniform(k4, (2, 3, 24, 24), dtype=jnp.float32)
    out2 = jax.block_until_ready(psnr_pallas(raw2, dst2, tile_n=256))
    ref2 = psnr_ref(raw2, dst2)
    assert jnp.allclose(out2, ref2, rtol=1e-4, atol=1e-4), (out2, ref2)

    print("KERNEL_OK")
</pallas_src>

<mosaic_0001>
module attributes {stable_mosaic.version = 11 : i64} {
  func.func @kernel(%arg0: i32, %arg1: i32, %arg2: i32, %arg3: memref<2x1024xf32, #tpu.memory_space<vmem>>, %arg4: memref<2x1024xf32, #tpu.memory_space<vmem>>, %arg5: memref<1x2x1xf32, #tpu.memory_space<vmem>>) attributes {dimension_semantics = [#tpu.dimension_semantics<arbitrary>, #tpu.dimension_semantics<parallel>, #tpu.dimension_semantics<arbitrary>], iteration_bounds = array<i64: 1, 1, 1>, scalar_prefetch = 0 : i64, scratch_operands = 0 : i64, tpu.core_type = #tpu.core_type<tc>, window_params = [{transform_indices = @transform_0, window_bounds = array<i64: 2, 1024>}, {transform_indices = @transform_1, window_bounds = array<i64: 2, 1024>}, {transform_indices = @transform_2, window_bounds = array<i64: 1, 2, 1>}]} {
    %c0_i32 = arith.constant 0 : i32
    %0 = arith.cmpi eq, %arg2, %c0_i32 : i32
    %1 = arith.extui %0 : i1 to i32
    %c0_i32_0 = arith.constant 0 : i32
    %2 = arith.cmpi ne, %1, %c0_i32_0 : i32
    scf.if %2 {
      %cst_12 = arith.constant 0.000000e+00 : f32
      %23 = vector.broadcast %cst_12 : f32 to vector<1x2x1xf32>
      %c0_13 = arith.constant 0 : index
      %c0_14 = arith.constant 0 : index
      %c0_15 = arith.constant 0 : index
      %24 = vector.load %arg5[%c0_13, %c0_14, %c0_15] : memref<1x2x1xf32, #tpu.memory_space<vmem>>, vector<1x2x1xf32>
      tpu.vector_store %arg5[%c0_13, %c0_14, %c0_15], %23 {strides = array<i32>} : memref<1x2x1xf32, #tpu.memory_space<vmem>>, vector<1x2x1xf32>,
    } else {
    }
    %c0 = arith.constant 0 : index
    %c0_1 = arith.constant 0 : index
    %3 = vector.load %arg3[%c0, %c0_1] : memref<2x1024xf32, #tpu.memory_space<vmem>>, vector<2x1024xf32>
    %c0_2 = arith.constant 0 : index
    %c0_3 = arith.constant 0 : index
    %4 = vector.load %arg4[%c0_2, %c0_3] : memref<2x1024xf32, #tpu.memory_space<vmem>>, vector<2x1024xf32>
    %5 = arith.subf %3, %4 : vector<2x1024xf32>
    %c1_i32 = arith.constant 1 : i32
    %6 = arith.muli %arg0, %c1_i32 : i32
    %7 = arith.addi %6, %arg2 : i32
    %c1024_i32 = arith.constant 1024 : i32
    %8 = arith.muli %7, %c1024_i32 : i32
    %9 = tpu.iota {dimensions = array<i32: 1>} : vector<2x1024xi32>
    %10 = vector.broadcast %8 : i32 to vector<2x1024xi32>
    %11 = arith.addi %10, %9 : vector<2x1024xi32>
    %c1024_i32_4 = arith.constant 1024 : i32
    %12 = vector.broadcast %c1024_i32_4 : i32 to vector<2x1024xi32>
    %13 = arith.cmpi slt, %11, %12 : vector<2x1024xi32>
    %cst = arith.constant 0.000000e+00 : f32
    %14 = vector.broadcast %cst : f32 to vector<2x1024xf32>
    %15 = arith.select %13, %5, %14 : vector<2x1024xi1>, vector<2x1024xf32>
    %c0_5 = arith.constant 0 : index
    %c0_6 = arith.constant 0 : index
    %c0_7 = arith.constant 0 : index
    %16 = vector.load %arg5[%c0_5, %c0_6, %c0_7] : memref<1x2x1xf32, #tpu.memory_space<vmem>>, vector<1x2x1xf32>
    %17 = arith.mulf %15, %15 : vector<2x1024xf32>
    %cst_8 = arith.constant dense<0.000000e+00> : vector<2xf32>
    %18 = vector.multi_reduction <add>, %17, %cst_8 [1] : vector<2x1024xf32> to vector<2xf32>
    %19 = vector.shape_cast %18 : vector<2xf32> to vector<2x1xf32>
    %20 = vector.shape_cast %19 : vector<2x1xf32> to vector<1x2x1xf32>
    %21 = arith.addf %16, %20 : vector<1x2x1xf32>
    %c0_9 = arith.constant 0 : index
    %c0_10 = arith.constant 0 : index
    %c0_11 = arith.constant 0 : index
    %22 = vector.load %arg5[%c0_9, %c0_10, %c0_11] : memref<1x2x1xf32, #tpu.memory_space<vmem>>, vector<1x2x1xf32>
    tpu.vector_store %arg5[%c0_9, %c0_10, %c0_11], %21 {strides = array<i32>} : memref<1x2x1xf32, #tpu.memory_space<vmem>>, vector<1x2x1xf32>,
    return
  }
  func.func @transform_0(%arg0: i32, %arg1: i32, %arg2: i32) -> (i32, i32) {
    %c1_i32 = arith.constant 1 : i32
    %0 = arith.muli %arg0, %c1_i32 : i32
    %1 = arith.addi %0, %arg2 : i32
    %c0_i32 = arith.constant 0 : i32
    %2 = arith.minsi %1, %c0_i32 : i32
    %c0_i32_0 = arith.constant 0 : i32
    return %arg1, %2 : i32, i32
  }
  func.func @transform_1(%arg0: i32, %arg1: i32, %arg2: i32) -> (i32, i32) {
    %c1_i32 = arith.constant 1 : i32
    %0 = arith.muli %arg0, %c1_i32 : i32
    %1 = arith.addi %0, %arg2 : i32
    %c0_i32 = arith.constant 0 : i32
    %2 = arith.minsi %1, %c0_i32 : i32
    %c0_i32_0 = arith.constant 0 : i32
    return %arg1, %2 : i32, i32
  }
  func.func @transform_2(%arg0: i32, %arg1: i32, %arg2: i32) -> (i32, i32, i32) {
    %c0_i32 = arith.constant 0 : i32
    %c0_i32_0 = arith.constant 0 : i32
    return %arg0, %arg1, %c0_i32 : i32, i32, i32
  }
}

</mosaic_0001>

<llo_original>
// kernel: tpu_custom_call.1
$region0: #{tpu_custom_call.1}
  #allocation0 [shape = 'u32[]', space=smem, size = 0x4, offset = 0x4, fixed_abs, tag = 'smem constant byte address 0x4 - core index']
  #allocation1 [shape = 'u32[144,128]{1,0:T(1,128)}', space=vmem, size = 0x12000, scoped, tag = 'internal scratch']
  %s0 = inlined_call_operand.hbm [shape: f32[2,1024], index: 0, kind: input, shape index: {}]
  %s1 = inlined_call_operand.hbm [shape: f32[2,1024], index: 1, kind: input, shape index: {}]
  %s2 = inlined_call_operand.vmem [shape: f32[1,2,1], index: 2, kind: output, shape index: {}]
  %s3 = sld [smem:[#allocation0]]
  $region30: #{tpu_custom_call.1} parent=0
    _
  %s5 = ssub.s32 1, %s3
  %s6 = scalar_select 0, %s5, %s3
  $region1: #{tpu_custom_call.1} parent=0
    #allocation2 [shape = 'u8[8192]{0}', space=vmem, size = 0x2000, scoped, tag = 'input window, operand 0, single buffered']
    #allocation3 [shape = 's32[1]{0}', space=sflag, size = 0x4, scoped, tag = 'scoped memory for tpu_custom_call.1']
    #allocation4 [shape = 'u8[8192]{0}', space=vmem, size = 0x2000, scoped, tag = 'input window, operand 1, single buffered']
    #allocation5 [shape = 's32[1]{0}', space=sflag, size = 0x4, scoped, tag = 'scoped memory for tpu_custom_call.1']
    %7 = vsyncpa [#allocation3], 0
    %8 = vsyncpa [#allocation5], 0
    // Predicated region
    $region2: #{tpu_custom_call.1} parent=1 // pred_check
      _
    $region3: #{tpu_custom_call.1} parent=1 // pred_check_branch
      %10 = sbr.rel (0) target = $region5
    $region4: #{tpu_custom_call.1} parent=1 // pred_region
      %s11 = sadd.s32 0, 0
      %p12 = scmp.lt.s32.totalorder %s11, 0
      %s13 = scalar_select %p12, %s11, 0
      %s14 = smul.u32 8, %s13
      %s16 = ssub.s32 256, 256
      %17 = vsyncadd [#allocation3], %s16
      %s18 = smul.addr %s14, 32
      %s19 = scalar_lea.hbm %s0, %s18
      %s21 = sshll.u32 [#allocation2], 4
      %s22 = int_to_ptr.vmem [resolvable:$true] %s21
      %24 = dma.hbm_to_vmem [thread:$0]  %s19, 256, %s22, [#allocation3]
    $region5: #{tpu_custom_call.1} parent=1 // pred_fallthru
      _
    // Predicated region
    $region6: #{tpu_custom_call.1} parent=1 // pred_check
      _
    $region7: #{tpu_custom_call.1} parent=1 // pred_check_branch
      %26 = sbr.rel (0) target = $region9
    $region8: #{tpu_custom_call.1} parent=1 // pred_region
      %s27 = sadd.s32 0, 0
      %p28 = scmp.lt.s32.totalorder %s27, 0
      %s29 = scalar_select %p28, %s27, 0
      %s30 = smul.u32 8, %s29
      %s32 = ssub.s32 256, 256
      %33 = vsyncadd [#allocation5], %s32
      %s34 = smul.addr %s30, 32
      %s35 = scalar_lea.hbm %s1, %s34
      %s37 = sshll.u32 [#allocation4], 4
      %s38 = int_to_ptr.vmem [resolvable:$true] %s37
      %40 = dma.hbm_to_vmem [thread:$0]  %s35, 256, %s38, [#allocation5]
    $region9: #{tpu_custom_call.1} parent=1 // pred_fallthru
      _
    // Predicated region
    $region10: #{tpu_custom_call.1} parent=1 // pred_check
      _
    $region11: #{tpu_custom_call.1} parent=1 // pred_check_branch
      %42 = sbr.rel (0) target = $region13
    $region12: #{tpu_custom_call.1} parent=1 // pred_region
      %43 = dma.done [#allocation3], 256
    $region13: #{tpu_custom_call.1} parent=1 // pred_fallthru
      _
    // Predicated region
    $region14: #{tpu_custom_call.1} parent=1 // pred_check
      _
    $region15: #{tpu_custom_call.1} parent=1 // pred_check_branch
      %45 = sbr.rel (0) target = $region17
    $region16: #{tpu_custom_call.1} parent=1 // pred_region
      %46 = dma.done [#allocation5], 256
    $region17: #{tpu_custom_call.1} parent=1 // pred_fallthru
      _
    %s47 = sadd.s32 0, 0
    %p48 = scmp.lt.s32.totalorder %s47, 0
    %s49 = scalar_select %p48, %s47, 0
    %s50 = smul.u32 8, %s49
    %s51 = sadd.s32 0, 0
    %p52 = scmp.lt.s32.totalorder %s51, 0
    %s53 = scalar_select %p52, %s51, 0
    %s54 = smul.u32 8, %s53
    %p55 = scmp.eq.s32.totalorder 0, 0
    // Predicated region
    $region18: #{tpu_custom_call.1} parent=1 // pred_check
      %p56 = pneg %p55
    $region19: #{tpu_custom_call.1} parent=1 // pred_check_branch
      %58 = sbr.rel (%p56) target = $region21
    $region20: #{tpu_custom_call.1} parent=1 // pred_region
      %vm59 = vcmask 1024
      %60 = vst.msk [vmem:[%s2] sm:$0x3] %vm59, 0.0
    $region21: #{tpu_custom_call.1} parent=1 // pred_fallthru
      _
    %v61 = vld [vmem:[#allocation2] sm:$0xff]
    %v62 = vld [vmem:[#allocation2 + $0x8] sm:$0xff]
    %v63 = vld [vmem:[#allocation4] sm:$0xff]
    %v64 = vld [vmem:[#allocation4 + $0x8] sm:$0xff]
    %v65 = vsub.f32 %v61, %v63
    %v66 = vsub.f32 %v62, %v64
    %s67 = sadd.s32 0, 0
    %s68 = smul.u32 %s67, 1024
    %v69 = vlaneseq
    %v70 = vand.u32 %v69, 127
    %v71 = vadd.s32 %v70, 128
    %v72 = vadd.s32 %v70, 256
    %v73 = vadd.s32 %v70, 384
    %v74 = vadd.s32 %v70, 512
    %v75 = vadd.s32 %v70, 640
    %v76 = vadd.s32 %v70, 768
    %v77 = vadd.s32 %v70, 896
    %v78 = vstv %s68
    %v79 = vadd.s32 %v78, %v70
    %v80 = vadd.s32 %v78, %v71
    %v81 = vadd.s32 %v78, %v72
    %v82 = vadd.s32 %v78, %v73
    %v83 = vadd.s32 %v78, %v74
    %v84 = vadd.s32 %v78, %v75
    %v85 = vadd.s32 %v78, %v76
    %v86 = vadd.s32 %v78, %v77
    %vm87 = vcmp.lt.s32.totalorder %v79, 1024
    %vm88 = vcmp.lt.s32.totalorder %v80, 1024
    %vm89 = vcmp.lt.s32.totalorder %v81, 1024
    %vm90 = vcmp.lt.s32.totalorder %v82, 1024
    %vm91 = vcmp.lt.s32.totalorder %v83, 1024
    %vm92 = vcmp.lt.s32.totalorder %v84, 1024
    %vm93 = vcmp.lt.s32.totalorder %v85, 1024
    %vm94 = vcmp.lt.s32.totalorder %v86, 1024
    %v97 = vcombine.high %v65, %v65
    %v99 = vunpack.c.l.s4 1983009808
    %v100 = vunpack.c.0.s8 %v99
    %v101 = vlaneseq
    %v102 = vshrl.u32 %v101, 7
    %v103 = vsub.s32 %v100, %v102
    %v104 = vrot.slane %v65, %v103
    %v106 = vunpack.c.l.s4 1983009808
    %v107 = vunpack.c.0.s8 %v106
    %v108 = vlaneseq
    %v109 = vshrl.u32 %v108, 7
    %v110 = vsub.s32 %v107, %v109
    %v111 = vrot.slane %v97, %v110
    %v112 = vcombine.high %v104, %v104
    %v113 = vcombine.high %v111, %v111
    %v114 = vcombine.high %v66, %v66
    %v116 = vunpack.c.l.s4 1983009808
    %v117 = vunpack.c.0.s8 %v116
    %v118 = vlaneseq
    %v119 = vshrl.u32 %v118, 7
    %v120 = vsub.s32 %v117, %v119
    %v121 = vrot.slane %v66, %v120
    %v123 = vunpack.c.l.s4 1983009808
    %v124 = vunpack.c.0.s8 %v123
    %v125 = vlaneseq
    %v126 = vshrl.u32 %v125, 7
    %v127 = vsub.s32 %v124, %v126
    %v128 = vrot.slane %v114, %v127
    %v129 = vcombine.high %v121, %v121
    %v130 = vcombine.high %v128, %v128
    %v139 = vsel %vm87, %v104, 0.0
    %v140 = vsel %vm88, %v112, 0.0
    %v141 = vsel %vm89, %v111, 0.0
    %v142 = vsel %vm90, %v113, 0.0
    %v143 = vsel %vm91, %v121, 0.0
    %v144 = vsel %vm92, %v129, 0.0
    %v145 = vsel %vm93, %v128, 0.0
    %v146 = vsel %vm94, %v130, 0.0
    %v147 = vld [vmem:[%s2] sm:$0x3]
    %v148 = vmul.f32 %v139, %v139
    %v149 = vmul.f32 %v140, %v140
    %v150 = vmul.f32 %v141, %v141
    %v151 = vmul.f32 %v142, %v142
    %v152 = vmul.f32 %v143, %v143
    %v153 = vmul.f32 %v144, %v144
    %v154 = vmul.f32 %v145, %v145
    %v155 = vmul.f32 %v146, %v146
    %vm156 = vcmask 1041408
    %v157 = vsel %vm156, %v148, 0.0
    %v158 = vsel %vm156, %v149, 0.0
    %v159 = vadd.f32 %v157, %v158
    %v160 = vsel %vm156, %v150, 0.0
    %v161 = vadd.f32 %v159, %v160
    %v162 = vsel %vm156, %v151, 0.0
    %v163 = vadd.f32 %v161, %v162
    %v164 = vsel %vm156, %v152, 0.0
    %v165 = vadd.f32 %v163, %v164
    %v166 = vsel %vm156, %v153, 0.0
    %v167 = vadd.f32 %v165, %v166
    %v168 = vsel %vm156, %v154, 0.0
    %v169 = vadd.f32 %v167, %v168
    %v170 = vsel %vm156, %v155, 0.0
    %v171 = vadd.f32 %v169, %v170
    %172 = vadd.xlane.f32.xlu0 %v171
    %v173 = vpop.xlane.xlu0 %172
    %v174 = vadd.f32 %v147, %v173
    %vm175 = vcmask 1024
    %176 = vst.msk [vmem:[%s2] sm:$0x3] %vm175, %v174
    // Predicated region
    $region22: #{tpu_custom_call.1} parent=1 // pred_check
      _
    $region23: #{tpu_custom_call.1} parent=1 // pred_check_branch
      %178 = sbr.rel (0) target = $region25
    $region24: #{tpu_custom_call.1} parent=1 // pred_region
      _
    $region25: #{tpu_custom_call.1} parent=1 // pred_fallthru
      _
    // Predicated region
    $region26: #{tpu_custom_call.1} parent=1 // pred_check
      _
    $region27: #{tpu_custom_call.1} parent=1 // pred_check_branch
      %180 = sbr.rel (0) target = $region29
    $region28: #{tpu_custom_call.1} parent=1 // pred_region
      _
    $region29: #{tpu_custom_call.1} parent=1 // pred_fallthru
      _
    %181 = vsyncpa [#allocation3], 1
    %182 = vsyncpa [#allocation5], 1

</llo_original>
